<compile_context>
chip_gen: v6e
topology: v6e:2x2x1
jax: 0.10.0
libtpu: 0.0.40
codegen_flags: <defaults>
</compile_context>

<pallas_src>
import math

import jax
import jax.numpy as jnp
from jax.experimental import pallas as pl
from jax.experimental.pallas import tpu as pltpu


def _round_up(x, m):
    return ((x + m - 1) // m) * m


def _padded_bytes(rows, cols, dtype):
    """Conservative VMEM footprint of a (rows, cols) buffer after (sublane, lane) tiling."""
    itemsize = jnp.dtype(dtype).itemsize
    sublane = 8 * max(1, 4 // itemsize)          # 8 rows for f32, 16 for bf16
    return _round_up(max(rows, 1), sublane) * _round_up(max(cols, 1), 128) * itemsize


def _vmem_capacity_bytes():
    try:
        return int(pltpu.get_tpu_info().vmem_capacity_bytes)
    except Exception:
        return 64 * 1024 * 1024                  # v7x-safe fallback


def _plan_tiles(batch, latent, hidden, output, w_dtype, x_dtype, out_dtype,
                tile_b_max, budget, weight_buffers):
    """Pick (tile_b, tile_n) so weights + streams + intermediates fit the VMEM budget."""

    def weight_bytes(tile_n):
        return weight_buffers * (
            _padded_bytes(latent, hidden, w_dtype)
            + _padded_bytes(1, hidden, jnp.float32)
            + _padded_bytes(hidden, tile_n, w_dtype)
            + _padded_bytes(1, tile_n, jnp.float32))

    def stream_bytes(tb, tile_n):
        stream = 2 * (_padded_bytes(tb, latent, x_dtype)        # x in (double-buffered)
                      + _padded_bytes(tb, tile_n, out_dtype))   # out  (double-buffered)
        interm = (_padded_bytes(tb, latent, w_dtype)            # x cast copy
                  + _padded_bytes(tb, hidden, jnp.float32)      # h f32 accumulator
                  + _padded_bytes(tb, hidden, w_dtype)          # h cast copy
                  + _padded_bytes(tb, tile_n, jnp.float32))     # out f32 accumulator
        return stream + interm

    # Weight-resident if they fit; otherwise stream w2 / b2 in 128-wide N tiles.
    tile_n = output
    if weight_bytes(tile_n) + stream_bytes(8, tile_n) > budget:
        tile_n = _round_up(output, 128)
        while tile_n > 128 and weight_bytes(tile_n) + stream_bytes(8, tile_n) > budget:
            tile_n = _round_up(tile_n // 2, 128)

    # Batch tile: as large as fits, but keep >= 4 grid steps when the batch
    # permits so megacore sharding and the DMA pipeline actually have work.
    batch8 = _round_up(batch, 8)
    tile_b = min(_round_up(tile_b_max, 8), batch8)
    if batch8 >= 32:
        tile_b = min(tile_b, max(8, _round_up(batch8 // 4, 8)))
    while tile_b > 8 and weight_bytes(tile_n) + stream_bytes(tile_b, tile_n) > budget:
        tile_b -= 8

    est = weight_bytes(tile_n) + stream_bytes(tile_b, tile_n)
    return tile_b, tile_n, est


def _decoder_kernel(x_ref, w1_ref, b1_ref, w2_ref, b2_ref, o_ref):
    # Cast the streamed activations to the MXU operand dtype on the VPU
    # (x stays f32 in HBM; no wrapper pad/cast pass).
    x = x_ref[...].astype(w1_ref.dtype)
    # Hidden layer on the MXU, f32 accumulate.
    h = jnp.dot(x, w1_ref[...], preferred_element_type=jnp.float32)
    # Bias add (VPU) + tanh (EUP) in f32; b1 is (1, H) and broadcasts over rows.
    h = jnp.tanh(h + b1_ref[...])
    # Output layer: bf16/f32 operands, f32 accumulate, f32 bias add.
    out = jnp.dot(h.astype(w2_ref.dtype), w2_ref[...],
                  preferred_element_type=jnp.float32)
    o_ref[...] = (out + b2_ref[...]).astype(o_ref.dtype)


def prepare_decoder_params(w1, b1, w2, b2, *, param_dtype=jnp.bfloat16):
    """One-time (hoisted) parameter prep: operand-dtype cast + bias reshape.

    Weights are stored as (in_features, out_features) == torch W^T, cast to the
    MXU operand dtype (bf16 by default; accumulation happens in f32 in-kernel).
    Biases stay f32 since the bias add + tanh run on the f32 accumulator.
    """
    return (w1.astype(param_dtype),
            b1.reshape(1, -1).astype(jnp.float32),
            w2.astype(param_dtype),
            b2.reshape(1, -1).astype(jnp.float32))


def decoder_forward(x, params, *, out_dtype=None, tile_b_max=512,
                    single_buffer_weights=True):
    """Decoder forward pass as a single batch-tiled (and, if needed, N-tiled) Pallas kernel.

    Args:
      x:      (batch, latent_dim) activations (streamed, cast in-kernel).
      params: output of prepare_decoder_params().
      out_dtype: output dtype (defaults to x.dtype).
    Returns:
      (batch, output_dim) array.
    """
    w1, b1, w2, b2 = params
    batch, latent = x.shape
    hidden = w1.shape[1]
    output = w2.shape[1]
    if out_dtype is None:
        out_dtype = x.dtype

    cap = _vmem_capacity_bytes()
    budget = int(0.70 * cap)
    tile_b, tile_n, est = _plan_tiles(
        batch, latent, hidden, output, w1.dtype, x.dtype, out_dtype,
        tile_b_max, budget, weight_buffers=1 if single_buffer_weights else 2)

    grid_b = pl.cdiv(batch, tile_b)       # last block may be partial (masked writes)
    grid_n = pl.cdiv(output, tile_n)
    w2_invariant = (grid_n == 1)

    def wspec(shape, imap, invariant):
        # Grid-invariant weights/biases stay VMEM-resident; single-buffer them
        # so they are only counted once against VMEM (critical on v7x).
        if invariant and single_buffer_weights:
            return pl.BlockSpec(shape, imap, pipeline_mode=pl.Buffered(1))
        return pl.BlockSpec(shape, imap)

    in_specs = [
        # x: streamed per batch tile; same block across the N axis -> no re-fetch.
        pl.BlockSpec((tile_b, latent), lambda i, j: (i, 0)),
        # w1 / b1: grid-invariant, VMEM-resident.
        wspec((latent, hidden), lambda i, j: (0, 0), True),
        wspec((1, hidden), lambda i, j: (0, 0), True),
        # w2 / b2: resident when the whole output fits, else streamed N tiles.
        wspec((hidden, tile_n), lambda i, j: (0, j), w2_invariant),
        wspec((1, tile_n), lambda i, j: (0, j), w2_invariant),
    ]

    vmem_limit = int(min(0.92 * cap, max(est + (8 << 20), 32 << 20)))

    return pl.pallas_call(
        _decoder_kernel,
        out_shape=jax.ShapeDtypeStruct((batch, output), out_dtype),
        grid_spec=pltpu.PrefetchScalarGridSpec(
            num_scalar_prefetch=0,
            grid=(grid_b, grid_n),
            in_specs=in_specs,
            out_specs=pl.BlockSpec((tile_b, tile_n), lambda i, j: (i, j)),
        ),
        compiler_params=pltpu.CompilerParams(
            dimension_semantics=("parallel", "parallel"),
            vmem_limit_bytes=vmem_limit,
        ),
    )(x, w1, b1, w2, b2)


if __name__ == "__main__":
    latent_dim, hidden_dim, output_dim = 16, 32, 24
    batch = 8

    key = jax.random.PRNGKey(0)
    k1, k2, k3, k4, kx = jax.random.split(key, 5)

    # torch.nn.Linear-style init (uniform +/- 1/sqrt(fan_in)), stored as (in, out) == torch W^T.
    bound1 = 1.0 / math.sqrt(latent_dim)
    bound2 = 1.0 / math.sqrt(hidden_dim)
    w1 = jax.random.uniform(k1, (latent_dim, hidden_dim), jnp.float32, -bound1, bound1)
    b1 = jax.random.uniform(k2, (hidden_dim,), jnp.float32, -bound1, bound1)
    w2 = jax.random.uniform(k3, (hidden_dim, output_dim), jnp.float32, -bound2, bound2)
    b2 = jax.random.uniform(k4, (output_dim,), jnp.float32, -bound2, bound2)
    x = jax.random.normal(kx, (batch, latent_dim), jnp.float32)

    # Pure-JAX reference (same semantics as the torch module).
    ref = jnp.tanh(x @ w1 + b1) @ w2 + b2

    def run(params):
        try:
            return jax.block_until_ready(decoder_forward(x, params))
        except Exception:
            # Fallback if this jax / Mosaic version rejects pipeline_mode=Buffered(1).
            return jax.block_until_ready(
                decoder_forward(x, params, single_buffer_weights=False))

    # Default fast path: bf16 MXU operands, f32 accumulate / bias / tanh.
    params_bf16 = prepare_decoder_params(w1, b1, w2, b2)
    out_bf16 = run(params_bf16)
    assert out_bf16.shape == (batch, output_dim)
    assert jnp.allclose(out_bf16, ref, atol=2e-2, rtol=2e-2)

    # f32-operand path: bit-close parity with the reference.
    params_f32 = prepare_decoder_params(w1, b1, w2, b2, param_dtype=jnp.float32)
    out_f32 = run(params_f32)
    assert out_f32.shape == (batch, output_dim)
    assert jnp.allclose(out_f32, ref, atol=1e-5, rtol=1e-5)

    print("KERNEL_OK")
</pallas_src>

<mosaic_0001>
module attributes {stable_mosaic.version = 11 : i64} {
  func.func @_decoder_kernel(%arg0: i32, %arg1: i32, %arg2: memref<8x16xf32, #tpu.memory_space<vmem>>, %arg3: memref<16x32xbf16, #tpu.memory_space<vmem>>, %arg4: memref<1x32xf32, #tpu.memory_space<vmem>>, %arg5: memref<32x24xbf16, #tpu.memory_space<vmem>>, %arg6: memref<1x24xf32, #tpu.memory_space<vmem>>, %arg7: memref<8x24xf32, #tpu.memory_space<vmem>>) attributes {dimension_semantics = [#tpu.dimension_semantics<parallel>, #tpu.dimension_semantics<parallel>], iteration_bounds = array<i64: 1, 1>, scalar_prefetch = 0 : i64, scratch_operands = 0 : i64, tpu.core_type = #tpu.core_type<tc>, window_params = [{transform_indices = @transform_0, window_bounds = array<i64: 8, 16>}, {pipeline_mode = #tpu.pipeline_mode<synchronous>, transform_indices = @transform_1, window_bounds = array<i64: 16, 32>}, {pipeline_mode = #tpu.pipeline_mode<synchronous>, transform_indices = @transform_2, window_bounds = array<i64: 1, 32>}, {pipeline_mode = #tpu.pipeline_mode<synchronous>, transform_indices = @transform_3, window_bounds = array<i64: 32, 24>}, {pipeline_mode = #tpu.pipeline_mode<synchronous>, transform_indices = @transform_4, window_bounds = array<i64: 1, 24>}, {transform_indices = @transform_5, window_bounds = array<i64: 8, 24>}]} {
    %c0 = arith.constant 0 : index
    %c0_0 = arith.constant 0 : index
    %0 = vector.load %arg2[%c0, %c0_0] : memref<8x16xf32, #tpu.memory_space<vmem>>, vector<8x16xf32>
    %1 = arith.truncf %0 : vector<8x16xf32> to vector<8x16xbf16>
    %c0_1 = arith.constant 0 : index
    %c0_2 = arith.constant 0 : index
    %2 = vector.load %arg3[%c0_1, %c0_2] : memref<16x32xbf16, #tpu.memory_space<vmem>>, vector<16x32xbf16>
    %cst = arith.constant dense<0.000000e+00> : vector<8x32xf32>
    %3 = tpu.matmul %1, %2, %cst {dimension_numbers = #tpu.dot_dimension_numbers<[1], [0], [0], [1], [0, 0, 1, 1], [], []>} : vector<8x16xbf16>, vector<16x32xbf16>, vector<8x32xf32> -> vector<8x32xf32>
    %c0_3 = arith.constant 0 : index
    %c0_4 = arith.constant 0 : index
    %4 = vector.load %arg4[%c0_3, %c0_4] : memref<1x32xf32, #tpu.memory_space<vmem>>, vector<1x32xf32>
    %5 = vector.broadcast %4 : vector<1x32xf32> to vector<8x32xf32>
    %6 = arith.addf %3, %5 : vector<8x32xf32>
    %7 = math.tanh %6 : vector<8x32xf32>
    %8 = arith.truncf %7 : vector<8x32xf32> to vector<8x32xbf16>
    %c0_5 = arith.constant 0 : index
    %c0_6 = arith.constant 0 : index
    %9 = vector.load %arg5[%c0_5, %c0_6] : memref<32x24xbf16, #tpu.memory_space<vmem>>, vector<32x24xbf16>
    %cst_7 = arith.constant dense<0.000000e+00> : vector<8x24xf32>
    %10 = tpu.matmul %8, %9, %cst_7 {dimension_numbers = #tpu.dot_dimension_numbers<[1], [0], [0], [1], [0, 0, 1, 1], [], []>} : vector<8x32xbf16>, vector<32x24xbf16>, vector<8x24xf32> -> vector<8x24xf32>
    %c0_8 = arith.constant 0 : index
    %c0_9 = arith.constant 0 : index
    %11 = vector.load %arg6[%c0_8, %c0_9] : memref<1x24xf32, #tpu.memory_space<vmem>>, vector<1x24xf32>
    %12 = vector.broadcast %11 : vector<1x24xf32> to vector<8x24xf32>
    %13 = arith.addf %10, %12 : vector<8x24xf32>
    %c0_10 = arith.constant 0 : index
    %c0_11 = arith.constant 0 : index
    %14 = vector.load %arg7[%c0_10, %c0_11] : memref<8x24xf32, #tpu.memory_space<vmem>>, vector<8x24xf32>
    tpu.vector_store %arg7[%c0_10, %c0_11], %13 {strides = array<i32>} : memref<8x24xf32, #tpu.memory_space<vmem>>, vector<8x24xf32>,
    return
  }
  func.func @transform_0(%arg0: i32, %arg1: i32) -> (i32, i32) {
    %c0_i32 = arith.constant 0 : i32
    %c0_i32_0 = arith.constant 0 : i32
    return %arg0, %c0_i32 : i32, i32
  }
  func.func @transform_1(%arg0: i32, %arg1: i32) -> (i32, i32) {
    %c0_i32 = arith.constant 0 : i32
    %c0_i32_0 = arith.constant 0 : i32
    %c0_i32_1 = arith.constant 0 : i32
    return %c0_i32, %c0_i32_0 : i32, i32
  }
  func.func @transform_2(%arg0: i32, %arg1: i32) -> (i32, i32) {
    %c0_i32 = arith.constant 0 : i32
    %c0_i32_0 = arith.constant 0 : i32
    %c0_i32_1 = arith.constant 0 : i32
    return %c0_i32, %c0_i32_0 : i32, i32
  }
  func.func @transform_3(%arg0: i32, %arg1: i32) -> (i32, i32) {
    %c0_i32 = arith.constant 0 : i32
    %c0_i32_0 = arith.constant 0 : i32
    return %c0_i32, %arg1 : i32, i32
  }
  func.func @transform_4(%arg0: i32, %arg1: i32) -> (i32, i32) {
    %c0_i32 = arith.constant 0 : i32
    %c0_i32_0 = arith.constant 0 : i32
    return %c0_i32, %arg1 : i32, i32
  }
  func.func @transform_5(%arg0: i32, %arg1: i32) -> (i32, i32) {
    %c0_i32 = arith.constant 0 : i32
    return %arg0, %arg1 : i32, i32
  }
}

module attributes {stable_mosaic.version = 11 : i64} {
  func.func @_decoder_kernel(%arg0: i32, %arg1: i32, %arg2: memref<8x16xf32, #tpu.memory_space<vmem>>, %arg3: memref<16x32xbf16, #tpu.memory_space<vmem>>, %arg4: memref<1x32xf32, #tpu.memory_space<vmem>>, %arg5: memref<32x24xbf16, #tpu.memory_space<vmem>>, %arg6: memref<1x24xf32, #tpu.memory_space<vmem>>, %arg7: memref<8x24xf32, #tpu.memory_space<vmem>>) attributes {dimension_semantics = [#tpu.dimension_semantics<parallel>, #tpu.dimension_semantics<parallel>], iteration_bounds = array<i64: 1, 1>, scalar_prefetch = 0 : i64, scratch_operands = 0 : i64, tpu.core_type = #tpu.core_type<tc>, window_params = [{transform_indices = @transform_0, window_bounds = array<i64: 8, 16>}, {pipeline_mode = #tpu.pipeline_mode<synchronous>, transform_indices = @transform_1, window_bounds = array<i64: 16, 32>}, {pipeline_mode = #tpu.pipeline_mode<synchronous>, transform_indices = @transform_2, window_bounds = array<i64: 1, 32>}, {transform_indices = @transform_3, window_bounds = array<i64: 32, 24>}, {transform_indices = @transform_4, window_bounds = array<i64: 1, 24>}, {transform_indices = @transform_5, window_bounds = array<i64: 8, 24>}]} {
    %c0 = arith.constant 0 : index
    %c0_0 = arith.constant 0 : index
    %0 = vector.load %arg2[%c0, %c0_0] : memref<8x16xf32, #tpu.memory_space<vmem>>, vector<8x16xf32>
    %1 = arith.truncf %0 : vector<8x16xf32> to vector<8x16xbf16>
    %c0_1 = arith.constant 0 : index
    %c0_2 = arith.constant 0 : index
    %2 = vector.load %arg3[%c0_1, %c0_2] : memref<16x32xbf16, #tpu.memory_space<vmem>>, vector<16x32xbf16>
    %cst = arith.constant dense<0.000000e+00> : vector<8x32xf32>
    %3 = tpu.matmul %1, %2, %cst {dimension_numbers = #tpu.dot_dimension_numbers<[1], [0], [0], [1], [0, 0, 1, 1], [], []>} : vector<8x16xbf16>, vector<16x32xbf16>, vector<8x32xf32> -> vector<8x32xf32>
    %c0_3 = arith.constant 0 : index
    %c0_4 = arith.constant 0 : index
    %4 = vector.load %arg4[%c0_3, %c0_4] : memref<1x32xf32, #tpu.memory_space<vmem>>, vector<1x32xf32>
    %5 = vector.broadcast %4 : vector<1x32xf32> to vector<8x32xf32>
    %6 = arith.addf %3, %5 : vector<8x32xf32>
    %7 = math.tanh %6 : vector<8x32xf32>
    %8 = arith.truncf %7 : vector<8x32xf32> to vector<8x32xbf16>
    %c0_5 = arith.constant 0 : index
    %c0_6 = arith.constant 0 : index
    %9 = vector.load %arg5[%c0_5, %c0_6] : memref<32x24xbf16, #tpu.memory_space<vmem>>, vector<32x24xbf16>
    %cst_7 = arith.constant dense<0.000000e+00> : vector<8x24xf32>
    %10 = tpu.matmul %8, %9, %cst_7 {dimension_numbers = #tpu.dot_dimension_numbers<[1], [0], [0], [1], [0, 0, 1, 1], [], []>} : vector<8x32xbf16>, vector<32x24xbf16>, vector<8x24xf32> -> vector<8x24xf32>
    %c0_8 = arith.constant 0 : index
    %c0_9 = arith.constant 0 : index
    %11 = vector.load %arg6[%c0_8, %c0_9] : memref<1x24xf32, #tpu.memory_space<vmem>>, vector<1x24xf32>
    %12 = vector.broadcast %11 : vector<1x24xf32> to vector<8x24xf32>
    %13 = arith.addf %10, %12 : vector<8x24xf32>
    %c0_10 = arith.constant 0 : index
    %c0_11 = arith.constant 0 : index
    %14 = vector.load %arg7[%c0_10, %c0_11] : memref<8x24xf32, #tpu.memory_space<vmem>>, vector<8x24xf32>
    tpu.vector_store %arg7[%c0_10, %c0_11], %13 {strides = array<i32>} : memref<8x24xf32, #tpu.memory_space<vmem>>, vector<8x24xf32>,
    return
  }
  func.func @transform_0(%arg0: i32, %arg1: i32) -> (i32, i32) {
    %c0_i32 = arith.constant 0 : i32
    %c0_i32_0 = arith.constant 0 : i32
    return %arg0, %c0_i32 : i32, i32
  }
  func.func @transform_1(%arg0: i32, %arg1: i32) -> (i32, i32) {
    %c0_i32 = arith.constant 0 : i32
    %c0_i32_0 = arith.constant 0 : i32
    %c0_i32_1 = arith.constant 0 : i32
    return %c0_i32, %c0_i32_0 : i32, i32
  }
  func.func @transform_2(%arg0: i32, %arg1: i32) -> (i32, i32) {
    %c0_i32 = arith.constant 0 : i32
    %c0_i32_0 = arith.constant 0 : i32
    %c0_i32_1 = arith.constant 0 : i32
    return %c0_i32, %c0_i32_0 : i32, i32
  }
  func.func @transform_3(%arg0: i32, %arg1: i32) -> (i32, i32) {
    %c0_i32 = arith.constant 0 : i32
    %c0_i32_0 = arith.constant 0 : i32
    return %c0_i32, %arg1 : i32, i32
  }
  func.func @transform_4(%arg0: i32, %arg1: i32) -> (i32, i32) {
    %c0_i32 = arith.constant 0 : i32
    %c0_i32_0 = arith.constant 0 : i32
    return %c0_i32, %arg1 : i32, i32
  }
  func.func @transform_5(%arg0: i32, %arg1: i32) -> (i32, i32) {
    %c0_i32 = arith.constant 0 : i32
    return %arg0, %arg1 : i32, i32
  }
}

</mosaic_0001>

<llo_original>
// kernel: tpu_custom_call.1
$region0: #{tpu_custom_call.1}
  #allocation0 [shape = 'u32[]', space=smem, size = 0x4, offset = 0x4, fixed_abs, tag = 'smem constant byte address 0x4 - core index']
  #allocation1 [shape = 'u32[144,128]{1,0:T(1,128)}', space=vmem, size = 0x12000, scoped, tag = 'internal scratch']
  %s0 = inlined_call_operand.vmem [shape: f32[8,16], index: 0, kind: input, shape index: {}]
  %s1 = inlined_call_operand.vmem [shape: bf16[16,32], index: 1, kind: input, shape index: {}]
  %s2 = inlined_call_operand.vmem [shape: f32[1,32], index: 2, kind: input, shape index: {}]
  %s3 = inlined_call_operand.vmem [shape: bf16[32,24], index: 3, kind: input, shape index: {}]
  %s4 = inlined_call_operand.vmem [shape: f32[1,24], index: 4, kind: input, shape index: {}]
  %s5 = inlined_call_operand.hbm [shape: f32[8,24], index: 5, kind: output, shape index: {}]
  %s6 = sld [smem:[#allocation0]]
  $region30: #{tpu_custom_call.1} parent=0
    _
  %s8 = ssub.s32 1, %s6
  %s9 = scalar_select 0, %s8, %s6
  $region1: #{tpu_custom_call.1} parent=0
    #allocation2 [shape = 'u8[4096]{0}', space=vmem, size = 0x1000, scoped, tag = 'output window, operand 0, single buffered']
    #allocation3 [shape = 's32[1]{0}', space=sflag, size = 0x4, scoped, tag = 'scoped memory for tpu_custom_call.1']
    %10 = vsyncpa [#allocation3], 0
    // Predicated region
    $region2: #{tpu_custom_call.1} parent=1 // pred_check
      _
    $region3: #{tpu_custom_call.1} parent=1 // pred_check_branch
      %12 = sbr.rel (0) target = $region5
    $region4: #{tpu_custom_call.1} parent=1 // pred_region
      _
    $region5: #{tpu_custom_call.1} parent=1 // pred_fallthru
      _
    // Predicated region
    $region6: #{tpu_custom_call.1} parent=1 // pred_check
      _
    $region7: #{tpu_custom_call.1} parent=1 // pred_check_branch
      %14 = sbr.rel (0) target = $region9
    $region8: #{tpu_custom_call.1} parent=1 // pred_region
      _
    $region9: #{tpu_custom_call.1} parent=1 // pred_fallthru
      _
    // Predicated region
    $region10: #{tpu_custom_call.1} parent=1 // pred_check
      _
    $region11: #{tpu_custom_call.1} parent=1 // pred_check_branch
      %16 = sbr.rel (0) target = $region13
    $region12: #{tpu_custom_call.1} parent=1 // pred_region
      _
    $region13: #{tpu_custom_call.1} parent=1 // pred_fallthru
      _
    // Predicated region
    $region14: #{tpu_custom_call.1} parent=1 // pred_check
      _
    $region15: #{tpu_custom_call.1} parent=1 // pred_check_branch
      %18 = sbr.rel (0) target = $region17
    $region16: #{tpu_custom_call.1} parent=1 // pred_region
      _
    $region17: #{tpu_custom_call.1} parent=1 // pred_fallthru
      _
    // Predicated region
    $region18: #{tpu_custom_call.1} parent=1 // pred_check
      _
    $region19: #{tpu_custom_call.1} parent=1 // pred_check_branch
      %20 = sbr.rel (0) target = $region21
    $region20: #{tpu_custom_call.1} parent=1 // pred_region
      _
    $region21: #{tpu_custom_call.1} parent=1 // pred_fallthru
      _
    %v22 = vld [vmem:[%s0] sm:$0xff]
    %v23 = vpack.c.bf16 %v22, %v22
    %v24 = vld [vmem:[%s1] sm:$0xf]
    %v25 = vld [vmem:[%s1 + $0x4] sm:$0xf]
    %v26 = vld [vmem:[%s2] sm:$0x1]
    %v28 = vlaneseq
    %v29 = vshrl.u32 %v28, 7
    %v30 = vsub.s32 0, %v29
    %v31 = vrot.slane %v26, %v30
    %v35 = vunpack.c.l.b16 %v24
    %v36 = vunpack.c.l.b16 %v25
    %v37 = vpack.c.b16 %v36, %v35
    %vm39 = vcmask 130048
    %v41 = vsel %vm39, %v23, 0
    %43 = vmatprep.subr.bf16.mxu0 0
    %44 = vmatpush1.bf16.msra.mxu0 0
    %45 = vmatprep.subr.bf16.mxu0 0
    %46 = vmatpush1.bf16.msra.mxu0 0
    %47 = vmatprep.subr.bf16.mxu0 0
    %48 = vmatpush1.bf16.msra.mxu0 0
    %49 = vmatprep.subr.bf16.mxu0 0
    %50 = vmatpush1.bf16.msra.mxu0 0
    %51 = vmatprep.subr.bf16.mxu0 0
    %52 = vmatpush1.bf16.msra.mxu0 0
    %53 = vmatprep.subr.bf16.mxu0 0
    %54 = vmatpush1.bf16.msra.mxu0 0
    %55 = vmatprep.subr.bf16.mxu0 0
    %56 = vmatpush1.bf16.msra.mxu0 0
    %57 = vmatprep.subr.bf16.mxu0 0
    %58 = vmatpush1.bf16.msra.mxu0 %v37
    %59 = vmatprep.subr.bf16.mxu0 0
    %60 = vmatpush2.bf16.msra.mxu0 0
    %61 = vmatprep.subr.bf16.mxu0 0
    %62 = vmatpush2.bf16.msra.mxu0 0
    %63 = vmatprep.subr.bf16.mxu0 0
    %64 = vmatpush2.bf16.msra.mxu0 0
    %65 = vmatprep.subr.bf16.mxu0 0
    %66 = vmatpush2.bf16.msra.mxu0 0
    %67 = vmatprep.subr.bf16.mxu0 0
    %68 = vmatpush2.bf16.msra.mxu0 0
    %69 = vmatprep.subr.bf16.mxu0 0
    %70 = vmatpush2.bf16.msra.mxu0 0
    %71 = vmatprep.subr.bf16.mxu0 0
    %72 = vmatpush2.bf16.msra.mxu0 0
    %73 = vmatprep.subr.bf16.mxu0 0
    %74 = vmatpush2.bf16.msra.mxu0 0
    %75 = vmatprep.mubr.bf16.mxu0 0
    %76 = vmatmul.mubr.bf16.gmra.mxu0 %v41
    %v77 = vpop.f32.mrf.mxu0
    %v78 = vadd.f32 %v31, %v77
    %v79 = vpop.f32.mrf.mxu0
    %v80 = vpop.f32.mrf.mxu0
    %v81 = vpop.f32.mrf.mxu0
    %82 = vdwg.mxu0
    %v83 = vtanh.pop %v78
    %v84 = vpack.c.bf16 %v83, %v83
    %v85 = vld [vmem:[%s3] sm:$0xf]
    %v86 = vld [vmem:[%s3 + $0x4] sm:$0xf]
    %v87 = vld [vmem:[%s3 + $0x8] sm:$0xf]
    %v88 = vld [vmem:[%s3 + $0xc] sm:$0xf]
    %v89 = vld [vmem:[%s4] sm:$0x1]
    %v91 = vlaneseq
    %v92 = vshrl.u32 %v91, 7
    %v93 = vsub.s32 0, %v92
    %v94 = vrot.slane %v89, %v93
    %v100 = vunpack.c.l.b16 %v85
    %v101 = vunpack.c.l.b16 %v86
    %v102 = vunpack.c.l.b16 %v87
    %v103 = vunpack.c.l.b16 %v88
    %v104 = vpack.c.b16 %v101, %v100
    %v105 = vpack.c.b16 %v103, %v102
    %vm108 = vcmask 261120
    %v110 = vsel %vm108, %v84, 0
    %112 = vmatprep.subr.bf16.mxu0 0
    %113 = vmatpush1.bf16.msra.mxu0 0
    %114 = vmatprep.subr.bf16.mxu0 0
    %115 = vmatpush1.bf16.msra.mxu0 0
    %116 = vmatprep.subr.bf16.mxu0 0
    %117 = vmatpush1.bf16.msra.mxu0 0
    %118 = vmatprep.subr.bf16.mxu0 0
    %119 = vmatpush1.bf16.msra.mxu0 0
    %120 = vmatprep.subr.bf16.mxu0 0
    %121 = vmatpush1.bf16.msra.mxu0 0
    %122 = vmatprep.subr.bf16.mxu0 0
    %123 = vmatpush1.bf16.msra.mxu0 0
    %124 = vmatprep.subr.bf16.mxu0 0
    %125 = vmatpush1.bf16.msra.mxu0 %v105
    %126 = vmatprep.subr.bf16.mxu0 0
    %127 = vmatpush1.bf16.msra.mxu0 %v104
    %128 = vmatprep.subr.bf16.mxu0 0
    %129 = vmatpush2.bf16.msra.mxu0 0
    %130 = vmatprep.subr.bf16.mxu0 0
    %131 = vmatpush2.bf16.msra.mxu0 0
    %132 = vmatprep.subr.bf16.mxu0 0
    %133 = vmatpush2.bf16.msra.mxu0 0
    %134 = vmatprep.subr.bf16.mxu0 0
    %135 = vmatpush2.bf16.msra.mxu0 0
    %136 = vmatprep.subr.bf16.mxu0 0
    %137 = vmatpush2.bf16.msra.mxu0 0
    %138 = vmatprep.subr.bf16.mxu0 0
    %139 = vmatpush2.bf16.msra.mxu0 0
    %140 = vmatprep.subr.bf16.mxu0 0
    %141 = vmatpush2.bf16.msra.mxu0 0
    %142 = vmatprep.subr.bf16.mxu0 0
    %143 = vmatpush2.bf16.msra.mxu0 0
    %144 = vmatprep.mubr.bf16.mxu0 0
    %145 = vmatmul.mubr.bf16.gmra.mxu0 %v110
    %v146 = vpop.f32.mrf.mxu0
    %v147 = vadd.f32 %v94, %v146
    %v148 = vpop.f32.mrf.mxu0
    %v149 = vpop.f32.mrf.mxu0
    %v150 = vpop.f32.mrf.mxu0
    %151 = vdwg.mxu0
    %vm152 = vcmask 195584
    %153 = vst.msk [vmem:[#allocation2] sm:$0xff] %vm152, %v147
    // Predicated region
    $region22: #{tpu_custom_call.1} parent=1 // pred_check
      _
    $region23: #{tpu_custom_call.1} parent=1 // pred_check_branch
      %155 = sbr.rel (0) target = $region25
    $region24: #{tpu_custom_call.1} parent=1 // pred_region
      %s157 = ssub.s32 128, 128
      %158 = vsyncadd [#allocation3], %s157
      %s160 = sshll.u32 [#allocation2], 4
      %s161 = int_to_ptr.vmem [resolvable:$true] %s160
      %163 = dma.vmem_to_hbm [thread:$0]  %s161, 128, %s5, [#allocation3]
    $region25: #{tpu_custom_call.1} parent=1 // pred_fallthru
      _
    // Predicated region
    $region26: #{tpu_custom_call.1} parent=1 // pred_check
      _
    $region27: #{tpu_custom_call.1} parent=1 // pred_check_branch
      %165 = sbr.rel (0) target = $region29
    $region28: #{tpu_custom_call.1} parent=1 // pred_region
      %166 = dma.done [#allocation3], 128
    $region29: #{tpu_custom_call.1} parent=1 // pred_fallthru
      _
    %167 = vsyncpa [#allocation3], 1

// kernel: tpu_custom_call.1
$region0: #{tpu_custom_call.1}
  #allocation0 [shape = 'u32[]', space=smem, size = 0x4, offset = 0x4, fixed_abs, tag = 'smem constant byte address 0x4 - core index']
  #allocation1 [shape = 'u32[144,128]{1,0:T(1,128)}', space=vmem, size = 0x12000, scoped, tag = 'internal scratch']
  %s0 = inlined_call_operand.vmem [shape: f32[8,16], index: 0, kind: input, shape index: {}]
  %s1 = inlined_call_operand.vmem [shape: bf16[16,32], index: 1, kind: input, shape index: {}]
  %s2 = inlined_call_operand.vmem [shape: f32[1,32], index: 2, kind: input, shape index: {}]
  %s3 = inlined_call_operand.vmem [shape: bf16[32,24], index: 3, kind: input, shape index: {}]
  %s4 = inlined_call_operand.vmem [shape: f32[1,24], index: 4, kind: input, shape index: {}]
  %s5 = inlined_call_operand.hbm [shape: f32[8,24], index: 5, kind: output, shape index: {}]
  %s6 = sld [smem:[#allocation0]]
  $region30: #{tpu_custom_call.1} parent=0
    _
  %s8 = ssub.s32 1, %s6
  %s9 = scalar_select 0, %s8, %s6
  $region1: #{tpu_custom_call.1} parent=0
    #allocation2 [shape = 'u8[4096]{0}', space=vmem, size = 0x1000, scoped, tag = 'output window, operand 0, single buffered']
    #allocation3 [shape = 's32[1]{0}', space=sflag, size = 0x4, scoped, tag = 'scoped memory for tpu_custom_call.1']
    %10 = vsyncpa [#allocation3], 0
    // Predicated region
    $region2: #{tpu_custom_call.1} parent=1 // pred_check
      _
    $region3: #{tpu_custom_call.1} parent=1 // pred_check_branch
      %12 = sbr.rel (0) target = $region5
    $region4: #{tpu_custom_call.1} parent=1 // pred_region
      _
    $region5: #{tpu_custom_call.1} parent=1 // pred_fallthru
      _
    // Predicated region
    $region6: #{tpu_custom_call.1} parent=1 // pred_check
      _
    $region7: #{tpu_custom_call.1} parent=1 // pred_check_branch
      %14 = sbr.rel (0) target = $region9
    $region8: #{tpu_custom_call.1} parent=1 // pred_region
      _
    $region9: #{tpu_custom_call.1} parent=1 // pred_fallthru
      _
    // Predicated region
    $region10: #{tpu_custom_call.1} parent=1 // pred_check
      _
    $region11: #{tpu_custom_call.1} parent=1 // pred_check_branch
      %16 = sbr.rel (0) target = $region13
    $region12: #{tpu_custom_call.1} parent=1 // pred_region
      _
    $region13: #{tpu_custom_call.1} parent=1 // pred_fallthru
      _
    // Predicated region
    $region14: #{tpu_custom_call.1} parent=1 // pred_check
      _
    $region15: #{tpu_custom_call.1} parent=1 // pred_check_branch
      %18 = sbr.rel (0) target = $region17
    $region16: #{tpu_custom_call.1} parent=1 // pred_region
      _
    $region17: #{tpu_custom_call.1} parent=1 // pred_fallthru
      _
    // Predicated region
    $region18: #{tpu_custom_call.1} parent=1 // pred_check
      _
    $region19: #{tpu_custom_call.1} parent=1 // pred_check_branch
      %20 = sbr.rel (0) target = $region21
    $region20: #{tpu_custom_call.1} parent=1 // pred_region
      _
    $region21: #{tpu_custom_call.1} parent=1 // pred_fallthru
      _
    %v22 = vld [vmem:[%s0] sm:$0xff]
    %v23 = vpack.c.bf16 %v22, %v22
    %v24 = vld [vmem:[%s1] sm:$0xf]
    %v25 = vld [vmem:[%s1 + $0x4] sm:$0xf]
    %v26 = vld [vmem:[%s2] sm:$0x1]
    %v28 = vlaneseq
    %v29 = vshrl.u32 %v28, 7
    %v30 = vsub.s32 0, %v29
    %v31 = vrot.slane %v26, %v30
    %v35 = vunpack.c.l.b16 %v24
    %v36 = vunpack.c.l.b16 %v25
    %v37 = vpack.c.b16 %v36, %v35
    %vm39 = vcmask 130048
    %v41 = vsel %vm39, %v23, 0
    %43 = vmatprep.subr.bf16.mxu0 0
    %44 = vmatpush1.bf16.msra.mxu0 0
    %45 = vmatprep.subr.bf16.mxu0 0
    %46 = vmatpush1.bf16.msra.mxu0 0
    %47 = vmatprep.subr.bf16.mxu0 0
    %48 = vmatpush1.bf16.msra.mxu0 0
    %49 = vmatprep.subr.bf16.mxu0 0
    %50 = vmatpush1.bf16.msra.mxu0 0
    %51 = vmatprep.subr.bf16.mxu0 0
    %52 = vmatpush1.bf16.msra.mxu0 0
    %53 = vmatprep.subr.bf16.mxu0 0
    %54 = vmatpush1.bf16.msra.mxu0 0
    %55 = vmatprep.subr.bf16.mxu0 0
    %56 = vmatpush1.bf16.msra.mxu0 0
    %57 = vmatprep.subr.bf16.mxu0 0
    %58 = vmatpush1.bf16.msra.mxu0 %v37
    %59 = vmatprep.subr.bf16.mxu0 0
    %60 = vmatpush2.bf16.msra.mxu0 0
    %61 = vmatprep.subr.bf16.mxu0 0
    %62 = vmatpush2.bf16.msra.mxu0 0
    %63 = vmatprep.subr.bf16.mxu0 0
    %64 = vmatpush2.bf16.msra.mxu0 0
    %65 = vmatprep.subr.bf16.mxu0 0
    %66 = vmatpush2.bf16.msra.mxu0 0
    %67 = vmatprep.subr.bf16.mxu0 0
    %68 = vmatpush2.bf16.msra.mxu0 0
    %69 = vmatprep.subr.bf16.mxu0 0
    %70 = vmatpush2.bf16.msra.mxu0 0
    %71 = vmatprep.subr.bf16.mxu0 0
    %72 = vmatpush2.bf16.msra.mxu0 0
    %73 = vmatprep.subr.bf16.mxu0 0
    %74 = vmatpush2.bf16.msra.mxu0 0
    %75 = vmatprep.mubr.bf16.mxu0 0
    %76 = vmatmul.mubr.bf16.gmra.mxu0 %v41
    %v77 = vpop.f32.mrf.mxu0
    %v78 = vadd.f32 %v31, %v77
    %v79 = vpop.f32.mrf.mxu0
    %v80 = vpop.f32.mrf.mxu0
    %v81 = vpop.f32.mrf.mxu0
    %82 = vdwg.mxu0
    %v83 = vtanh.pop %v78
    %v84 = vpack.c.bf16 %v83, %v83
    %v85 = vld [vmem:[%s3] sm:$0xf]
    %v86 = vld [vmem:[%s3 + $0x4] sm:$0xf]
    %v87 = vld [vmem:[%s3 + $0x8] sm:$0xf]
    %v88 = vld [vmem:[%s3 + $0xc] sm:$0xf]
    %v89 = vld [vmem:[%s4] sm:$0x1]
    %v91 = vlaneseq
    %v92 = vshrl.u32 %v91, 7
    %v93 = vsub.s32 0, %v92
    %v94 = vrot.slane %v89, %v93
    %v100 = vunpack.c.l.b16 %v85
    %v101 = vunpack.c.l.b16 %v86
    %v102 = vunpack.c.l.b16 %v87
    %v103 = vunpack.c.l.b16 %v88
    %v104 = vpack.c.b16 %v101, %v100
    %v105 = vpack.c.b16 %v103, %v102
    %vm108 = vcmask 261120
    %v110 = vsel %vm108, %v84, 0
    %112 = vmatprep.subr.bf16.mxu0 0
    %113 = vmatpush1.bf16.msra.mxu0 0
    %114 = vmatprep.subr.bf16.mxu0 0
    %115 = vmatpush1.bf16.msra.mxu0 0
    %116 = vmatprep.subr.bf16.mxu0 0
    %117 = vmatpush1.bf16.msra.mxu0 0
    %118 = vmatprep.subr.bf16.mxu0 0
    %119 = vmatpush1.bf16.msra.mxu0 0
    %120 = vmatprep.subr.bf16.mxu0 0
    %121 = vmatpush1.bf16.msra.mxu0 0
    %122 = vmatprep.subr.bf16.mxu0 0
    %123 = vmatpush1.bf16.msra.mxu0 0
    %124 = vmatprep.subr.bf16.mxu0 0
    %125 = vmatpush1.bf16.msra.mxu0 %v105
    %126 = vmatprep.subr.bf16.mxu0 0
    %127 = vmatpush1.bf16.msra.mxu0 %v104
    %128 = vmatprep.subr.bf16.mxu0 0
    %129 = vmatpush2.bf16.msra.mxu0 0
    %130 = vmatprep.subr.bf16.mxu0 0
    %131 = vmatpush2.bf16.msra.mxu0 0
    %132 = vmatprep.subr.bf16.mxu0 0
    %133 = vmatpush2.bf16.msra.mxu0 0
    %134 = vmatprep.subr.bf16.mxu0 0
    %135 = vmatpush2.bf16.msra.mxu0 0
    %136 = vmatprep.subr.bf16.mxu0 0
    %137 = vmatpush2.bf16.msra.mxu0 0
    %138 = vmatprep.subr.bf16.mxu0 0
    %139 = vmatpush2.bf16.msra.mxu0 0
    %140 = vmatprep.subr.bf16.mxu0 0
    %141 = vmatpush2.bf16.msra.mxu0 0
    %142 = vmatprep.subr.bf16.mxu0 0
    %143 = vmatpush2.bf16.msra.mxu0 0
    %144 = vmatprep.mubr.bf16.mxu0 0
    %145 = vmatmul.mubr.bf16.gmra.mxu0 %v110
    %v146 = vpop.f32.mrf.mxu0
    %v147 = vadd.f32 %v94, %v146
    %v148 = vpop.f32.mrf.mxu0
    %v149 = vpop.f32.mrf.mxu0
    %v150 = vpop.f32.mrf.mxu0
    %151 = vdwg.mxu0
    %vm152 = vcmask 195584
    %153 = vst.msk [vmem:[#allocation2] sm:$0xff] %vm152, %v147
    // Predicated region
    $region22: #{tpu_custom_call.1} parent=1 // pred_check
      _
    $region23: #{tpu_custom_call.1} parent=1 // pred_check_branch
      %155 = sbr.rel (0) target = $region25
    $region24: #{tpu_custom_call.1} parent=1 // pred_region
      %s157 = ssub.s32 128, 128
      %158 = vsyncadd [#allocation3], %s157
      %s160 = sshll.u32 [#allocation2], 4
      %s161 = int_to_ptr.vmem [resolvable:$true] %s160
      %163 = dma.vmem_to_hbm [thread:$0]  %s161, 128, %s5, [#allocation3]
    $region25: #{tpu_custom_call.1} parent=1 // pred_fallthru
      _
    // Predicated region
    $region26: #{tpu_custom_call.1} parent=1 // pred_check
      _
    $region27: #{tpu_custom_call.1} parent=1 // pred_check_branch
      %165 = sbr.rel (0) target = $region29
    $region28: #{tpu_custom_call.1} parent=1 // pred_region
      %166 = dma.done [#allocation3], 128
    $region29: #{tpu_custom_call.1} parent=1 // pred_fallthru
      _
    %167 = vsyncpa [#allocation3], 1

</llo_original>
